<compile_context>
chip_gen: v5e
topology: v5e:2x2
jax: 0.10.0
libtpu: 0.0.40
codegen_flags: <defaults>
</compile_context>

<pallas_src>
import jax
import jax.numpy as jnp
from jax.experimental import pallas as pl
from jax.experimental.pallas import tpu as pltpu


def _round_up(x, m):
    return ((x + m - 1) // m) * m


def _vmem_budget_bytes():
    """Per-generation VMEM budget with compiler headroom."""
    cap = 64 << 20  # conservative fallback (v7x-sized) if the query fails
    try:
        info = pltpu.get_tpu_info()
        cap = int(getattr(info, "vmem_capacity_bytes", cap))
    except Exception:
        pass
    if cap <= (64 << 20):          # v7x: 64 MiB physical -> leave headroom
        return 56 << 20
    return min(100 << 20, cap - (16 << 20))   # v5e / v6e: 128 MiB physical


# ----------------------------------------------------------------------------
# Kernels
# ----------------------------------------------------------------------------
def _query_mlp_kernel_resident(x_ref, w1_ref, b1_ref, w2_ref, b2_ref,
                               w3_ref, b3_ref, o_ref):
    """Path A: all weights VMEM-resident.  Grid = (batch tiles,)."""
    wdt = w1_ref.dtype
    # Layer 1: Linear(256 -> 128) + ReLU   (f32 accumulation on the MXU)
    h1 = jnp.dot(x_ref[...].astype(wdt), w1_ref[...],
                 preferred_element_type=jnp.float32)
    h1 = jnp.maximum(h1 + b1_ref[...].astype(jnp.float32), 0.0)
    # Layer 2: Linear(128 -> d_out) + ReLU
    h2 = jnp.dot(h1.astype(wdt), w2_ref[...],
                 preferred_element_type=jnp.float32)
    h2 = jnp.maximum(h2 + b2_ref[...].astype(jnp.float32), 0.0)
    # Layer 3: Linear(d_out -> d_out), no activation
    out = jnp.dot(h2.astype(wdt), w3_ref[...],
                  preferred_element_type=jnp.float32)
    o_ref[...] = (out + b3_ref[...].astype(jnp.float32)).astype(o_ref.dtype)


def _query_mlp_kernel_tiled(x_ref, w1_ref, b1_ref, w2_ref, b2_ref,
                            w3_ref, b3_ref, o_ref, h2_ref):
    """Path B: layer-3 column-tiled.  Grid = (column tiles OUTER, batch INNER).

    h2 for every batch tile is computed once during the first column pass
    (j == 0) and staged in a persistent VMEM scratch in the compute dtype, so
    each W3/b3 column tile is DMA'd exactly once regardless of batch tiling.
    """
    j = pl.program_id(0)
    i = pl.program_id(1)
    wdt = w1_ref.dtype

    @pl.when(j == 0)
    def _():
        h1 = jnp.dot(x_ref[...].astype(wdt), w1_ref[...],
                     preferred_element_type=jnp.float32)
        h1 = jnp.maximum(h1 + b1_ref[...].astype(jnp.float32), 0.0)
        h2 = jnp.dot(h1.astype(wdt), w2_ref[...],
                     preferred_element_type=jnp.float32)
        h2 = jnp.maximum(h2 + b2_ref[...].astype(jnp.float32), 0.0)
        h2_ref[i] = h2.astype(h2_ref.dtype)      # stored in compute dtype

    out = jnp.dot(h2_ref[i], w3_ref[...], preferred_element_type=jnp.float32)
    o_ref[...] = (out + b3_ref[...].astype(jnp.float32)).astype(o_ref.dtype)


# ----------------------------------------------------------------------------
# One-time parameter preprocessing (hoisted out of the forward path)
# ----------------------------------------------------------------------------
def prepare_params(params, *, weight_dtype=None):
    """Pad d_out up to a multiple of 128 and optionally cast to weight_dtype.

    Zero padding is mathematically inert and sliced off after the kernel.
    Returns a dict consumed by query_network_forward.  Do this ONCE at init:
    running it per forward call doubles the HBM weight traffic.
    """
    w1, b1, w2, b2, w3, b3 = params
    d_in, d_h = w1.shape
    d_out = w3.shape[1]
    d_out_p = _round_up(d_out, 128)
    pad = d_out_p - d_out
    if pad:
        w2 = jnp.pad(w2, ((0, 0), (0, pad)))
        b2 = jnp.pad(b2, ((0, 0), (0, pad)))
        w3 = jnp.pad(w3, ((0, pad), (0, pad)))
        b3 = jnp.pad(b3, ((0, 0), (0, pad)))
    if weight_dtype is not None:
        w1, b1, w2, b2, w3, b3 = (a.astype(weight_dtype)
                                  for a in (w1, b1, w2, b2, w3, b3))
    arrs = jax.block_until_ready(jax.device_put((w1, b1, w2, b2, w3, b3)))
    w1, b1, w2, b2, w3, b3 = arrs
    return dict(w1=w1, b1=b1, w2=w2, b2=b2, w3=w3, b3=b3,
                d_in=int(d_in), d_h=int(d_h),
                d_out=int(d_out), d_out_p=int(d_out_p))


# ----------------------------------------------------------------------------
# Forward
# ----------------------------------------------------------------------------
def query_network_forward(query, prepared, num_queries, c_o, *,
                          tb=None, tn=None, out_dtype=jnp.float32):
    """query: (B, 256). Returns (B, num_queries, c_o) in out_dtype."""
    w1, b1, w2, b2, w3, b3 = (prepared[k] for k in
                              ("w1", "b1", "w2", "b2", "w3", "b3"))
    d_in, d_h = prepared["d_in"], prepared["d_h"]
    d_out, d_out_p = prepared["d_out"], prepared["d_out_p"]
    assert d_out == num_queries * c_o

    B = query.shape[0]
    assert query.shape[1] == d_in

    w_itm = jnp.dtype(w3.dtype).itemsize
    x_itm = jnp.dtype(query.dtype).itemsize
    o_itm = jnp.dtype(out_dtype).itemsize

    # Batch tile: a single tile up to 256 rows.  The grid is a serial loop on
    # 1-TC chips, so splitting the batch only adds per-step overhead.
    B8 = _round_up(B, 8)
    if tb is None:
        tb = min(B8, 256)
    tb = _round_up(min(tb, B8), 8)
    B_p = _round_up(B, tb)
    if B_p != B:
        query = jnp.pad(query, ((0, B_p - B), (0, 0)))
    n_i = B_p // tb

    budget = _vmem_budget_bytes()
    # VMEM that is resident regardless of the layer-3 tiling choice:
    # W1/b1/W2/b2 (single-buffered) + the double-buffered x tile.
    resident_fixed = ((d_in * d_h + d_h + d_h * d_out_p + d_out_p) * w_itm
                      + 2 * tb * d_in * x_itm)

    resident = pl.Buffered(1)   # constant index_map -> single buffer, no 2x VMEM
    resident_w3 = (d_out_p * d_out_p + d_out_p) * w_itm
    resident_out = 2 * tb * d_out_p * o_itm
    use_resident = (tn is None) and \
        (resident_fixed + resident_w3 + resident_out <= budget)

    if use_resident:
        # ---- Path A: W3/b3 fully resident, grid = (batch tiles,) -----------
        in_specs = [
            pl.BlockSpec((tb, d_in), lambda i: (i, 0)),                                # x
            pl.BlockSpec((d_in, d_h), lambda i: (0, 0), pipeline_mode=resident),       # W1
            pl.BlockSpec((1, d_h), lambda i: (0, 0), pipeline_mode=resident),          # b1
            pl.BlockSpec((d_h, d_out_p), lambda i: (0, 0), pipeline_mode=resident),    # W2
            pl.BlockSpec((1, d_out_p), lambda i: (0, 0), pipeline_mode=resident),      # b2
            pl.BlockSpec((d_out_p, d_out_p), lambda i: (0, 0), pipeline_mode=resident),# W3
            pl.BlockSpec((1, d_out_p), lambda i: (0, 0), pipeline_mode=resident),      # b3
        ]
        out_specs = pl.BlockSpec((tb, d_out_p), lambda i: (i, 0))
        grid = (n_i,)
        kernel = _query_mlp_kernel_resident
        scratch_shapes = []
        dims = ("arbitrary",)
        vmem_needed = resident_fixed + resident_w3 + resident_out
    else:
        # ---- Path B: column-tiled W3, grid = (n_j outer, n_i inner) --------
        h2_bytes = n_i * tb * d_out_p * w_itm       # full-batch h2, compute dtype
        if tn is None:
            tn = 128
            cand = d_out_p
            while cand >= 128:
                if d_out_p % cand == 0:
                    need = (resident_fixed + h2_bytes
                            + 2 * (d_out_p * cand + cand) * w_itm   # W3/b3 tile x2
                            + 2 * tb * cand * o_itm)                # out tile x2
                    if need <= budget:
                        tn = cand
                        break
                cand -= 128
        assert d_out_p % tn == 0 and tn % 128 == 0
        n_j = d_out_p // tn

        in_specs = [
            pl.BlockSpec((tb, d_in), lambda j, i: (i, 0)),                              # x
            pl.BlockSpec((d_in, d_h), lambda j, i: (0, 0), pipeline_mode=resident),     # W1
            pl.BlockSpec((1, d_h), lambda j, i: (0, 0), pipeline_mode=resident),        # b1
            pl.BlockSpec((d_h, d_out_p), lambda j, i: (0, 0), pipeline_mode=resident),  # W2
            pl.BlockSpec((1, d_out_p), lambda j, i: (0, 0), pipeline_mode=resident),    # b2
            pl.BlockSpec((d_out_p, tn), lambda j, i: (0, j)),                           # W3 tile
            pl.BlockSpec((1, tn), lambda j, i: (0, j)),                                 # b3 tile
        ]
        out_specs = pl.BlockSpec((tb, tn), lambda j, i: (i, j))
        grid = (n_j, n_i)
        kernel = _query_mlp_kernel_tiled
        scratch_shapes = [pltpu.VMEM((n_i, tb, d_out_p), w3.dtype)]
        dims = ("arbitrary", "arbitrary")
        vmem_needed = (resident_fixed + h2_bytes
                       + 2 * (d_out_p * tn + tn) * w_itm
                       + 2 * tb * tn * o_itm)

    vmem_limit = int(min(max(vmem_needed * 5 // 4 + (2 << 20), 16 << 20), budget))

    # Weights are read exactly once in either path.
    flops = 2 * B_p * (d_in * d_h + d_h * d_out_p + d_out_p * d_out_p)
    weight_bytes = sum(int(a.size) * jnp.dtype(a.dtype).itemsize
                       for a in (w1, b1, w2, b2, w3, b3))
    bytes_accessed = (B_p * d_in * x_itm + weight_bytes + B_p * d_out_p * o_itm)

    out_flat = pl.pallas_call(
        kernel,
        out_shape=jax.ShapeDtypeStruct((B_p, d_out_p), out_dtype),
        grid_spec=pltpu.PrefetchScalarGridSpec(
            num_scalar_prefetch=0,
            grid=grid,
            in_specs=in_specs,
            out_specs=out_specs,
            scratch_shapes=scratch_shapes),
        compiler_params=pltpu.CompilerParams(
            dimension_semantics=dims,
            vmem_limit_bytes=vmem_limit),
        cost_estimate=pl.CostEstimate(
            flops=int(flops), transcendentals=0,
            bytes_accessed=int(bytes_accessed)),
    )(query, w1, b1, w2, b2, w3, b3)

    return out_flat[:B, :d_out].reshape(-1, num_queries, c_o)


# ----------------------------------------------------------------------------
# Parameter init / reference
# ----------------------------------------------------------------------------
def init_params(key, num_queries, c_k, c_s, dtype=jnp.float32):
    """Synthetic parameters matching nn.Linear shapes; weights stored as (in, out)."""
    c_o = c_k + c_s
    d_out = num_queries * c_o
    k1, k2, k3, k4, k5, k6 = jax.random.split(key, 6)
    w1 = jax.random.normal(k1, (256, 128), dtype) * 0.05
    b1 = jax.random.normal(k2, (1, 128), dtype) * 0.05
    w2 = jax.random.normal(k3, (128, d_out), dtype) * 0.05
    b2 = jax.random.normal(k4, (1, d_out), dtype) * 0.05
    w3 = jax.random.normal(k5, (d_out, d_out), dtype) * 0.05
    b3 = jax.random.normal(k6, (1, d_out), dtype) * 0.05
    return (w1, b1, w2, b2, w3, b3)


def reference_forward(query, params, num_queries, c_o):
    w1, b1, w2, b2, w3, b3 = [jnp.asarray(a, jnp.float32) for a in params]
    q = jnp.asarray(query, jnp.float32)
    h1 = jnp.maximum(q @ w1 + b1, 0.0)
    h2 = jnp.maximum(h1 @ w2 + b2, 0.0)
    out = h2 @ w3 + b3
    return out.reshape(-1, num_queries, c_o)


if __name__ == "__main__":
    key = jax.random.PRNGKey(0)

    # --- Config 1: small f32 (d_out = 128), W3 fully resident (Path A) ------
    nq1, c_k1, c_s1 = 4, 16, 16
    c_o1 = c_k1 + c_s1
    B1 = 8
    k1, k2, key = jax.random.split(key, 3)
    q1 = jax.random.normal(k1, (B1, 256), jnp.float32)
    p1 = init_params(k2, nq1, c_k1, c_s1)
    prep1 = prepare_params(p1)
    out1 = jax.block_until_ready(query_network_forward(q1, prep1, nq1, c_o1))
    ref1 = reference_forward(q1, p1, nq1, c_o1)
    assert out1.shape == (B1, nq1, c_o1), out1.shape
    assert jnp.allclose(out1, ref1, atol=1e-4, rtol=1e-4), (
        float(jnp.max(jnp.abs(out1 - ref1))))

    # --- Config 2: d_out = 1024, bf16 weights, still resident (Path A) ------
    nq2, c_k2, c_s2 = 16, 32, 32
    c_o2 = c_k2 + c_s2
    B2 = 64
    k3, k4, key = jax.random.split(key, 3)
    q2 = jax.random.normal(k3, (B2, 256), jnp.float32)
    p2 = init_params(k4, nq2, c_k2, c_s2)
    prep2 = prepare_params(p2, weight_dtype=jnp.bfloat16)   # cast paid once
    out2 = jax.block_until_ready(query_network_forward(q2, prep2, nq2, c_o2))
    quant = lambda a: a.astype(jnp.bfloat16).astype(jnp.float32)
    ref2 = reference_forward(quant(q2), tuple(quant(a) for a in p2), nq2, c_o2)
    assert out2.shape == (B2, nq2, c_o2), out2.shape
    assert jnp.allclose(out2, ref2, atol=3e-2, rtol=3e-2), (
        float(jnp.max(jnp.abs(out2 - ref2))))

    # --- Config 3: ragged shapes -> batch + d_out padding path (Path A) -----
    nq3, c_k3, c_s3 = 3, 16, 16            # d_out = 96 -> padded to 128
    c_o3 = c_k3 + c_s3
    B3 = 5                                 # padded to 8
    k5, k6, key = jax.random.split(key, 3)
    q3 = jax.random.normal(k5, (B3, 256), jnp.float32)
    p3 = init_params(k6, nq3, c_k3, c_s3)
    prep3 = prepare_params(p3)
    out3 = jax.block_until_ready(query_network_forward(q3, prep3, nq3, c_o3))
    ref3 = reference_forward(q3, p3, nq3, c_o3)
    assert out3.shape == (B3, nq3, c_o3), out3.shape
    assert jnp.allclose(out3, ref3, atol=1e-4, rtol=1e-4), (
        float(jnp.max(jnp.abs(out3 - ref3))))

    # --- Config 4: force the column-tiled fallback (Path B) -----------------
    # f32, d_out = 1024, tn=512 -> grid (2 column tiles, 2 batch tiles);
    # exercises the h2 VMEM staging and the "W3 read once" grid ordering.
    nq4, c_k4, c_s4 = 16, 32, 32
    c_o4 = c_k4 + c_s4
    B4 = 48                                # padded to 64 with tb=32
    k7, k8, key = jax.random.split(key, 3)
    q4 = jax.random.normal(k7, (B4, 256), jnp.float32)
    p4 = init_params(k8, nq4, c_k4, c_s4)
    prep4 = prepare_params(p4)
    out4 = jax.block_until_ready(
        query_network_forward(q4, prep4, nq4, c_o4, tb=32, tn=512))
    ref4 = reference_forward(q4, p4, nq4, c_o4)
    assert out4.shape == (B4, nq4, c_o4), out4.shape
    assert jnp.allclose(out4, ref4, atol=1e-4, rtol=1e-4), (
        float(jnp.max(jnp.abs(out4 - ref4))))

    print("KERNEL_OK")
</pallas_src>

<mosaic_0001>
module attributes {stable_mosaic.version = 11 : i64} {
  func.func @_query_mlp_kernel_resident(%arg0: i32, %arg1: memref<8x256xf32, #tpu.memory_space<vmem>>, %arg2: memref<256x128xf32, #tpu.memory_space<vmem>>, %arg3: memref<1x128xf32, #tpu.memory_space<vmem>>, %arg4: memref<128x128xf32, #tpu.memory_space<vmem>>, %arg5: memref<1x128xf32, #tpu.memory_space<vmem>>, %arg6: memref<128x128xf32, #tpu.memory_space<vmem>>, %arg7: memref<1x128xf32, #tpu.memory_space<vmem>>, %arg8: memref<8x128xf32, #tpu.memory_space<vmem>>) attributes {dimension_semantics = [#tpu.dimension_semantics<arbitrary>], iteration_bounds = array<i64: 1>, scalar_prefetch = 0 : i64, scratch_operands = 0 : i64, tpu.core_type = #tpu.core_type<tc>, window_params = [{transform_indices = @transform_0, window_bounds = array<i64: 8, 256>}, {pipeline_mode = #tpu.pipeline_mode<synchronous>, transform_indices = @transform_1, window_bounds = array<i64: 256, 128>}, {pipeline_mode = #tpu.pipeline_mode<synchronous>, transform_indices = @transform_2, window_bounds = array<i64: 1, 128>}, {pipeline_mode = #tpu.pipeline_mode<synchronous>, transform_indices = @transform_3, window_bounds = array<i64: 128, 128>}, {pipeline_mode = #tpu.pipeline_mode<synchronous>, transform_indices = @transform_4, window_bounds = array<i64: 1, 128>}, {pipeline_mode = #tpu.pipeline_mode<synchronous>, transform_indices = @transform_5, window_bounds = array<i64: 128, 128>}, {pipeline_mode = #tpu.pipeline_mode<synchronous>, transform_indices = @transform_6, window_bounds = array<i64: 1, 128>}, {transform_indices = @transform_7, window_bounds = array<i64: 8, 128>}]} {
    %c0 = arith.constant 0 : index
    %c0_0 = arith.constant 0 : index
    %0 = vector.load %arg1[%c0, %c0_0] : memref<8x256xf32, #tpu.memory_space<vmem>>, vector<8x256xf32>
    %c0_1 = arith.constant 0 : index
    %c0_2 = arith.constant 0 : index
    %1 = vector.load %arg2[%c0_1, %c0_2] : memref<256x128xf32, #tpu.memory_space<vmem>>, vector<256x128xf32>
    %cst = arith.constant dense<0.000000e+00> : vector<8x128xf32>
    %2 = tpu.matmul %0, %1, %cst {dimension_numbers = #tpu.dot_dimension_numbers<[1], [0], [0], [1], [0, 0, 1, 1], [], []>} : vector<8x256xf32>, vector<256x128xf32>, vector<8x128xf32> -> vector<8x128xf32>
    %c0_3 = arith.constant 0 : index
    %c0_4 = arith.constant 0 : index
    %3 = vector.load %arg3[%c0_3, %c0_4] : memref<1x128xf32, #tpu.memory_space<vmem>>, vector<1x128xf32>
    %4 = vector.broadcast %3 : vector<1x128xf32> to vector<8x128xf32>
    %5 = arith.addf %2, %4 : vector<8x128xf32>
    %cst_5 = arith.constant 0.000000e+00 : f32
    %6 = vector.broadcast %cst_5 : f32 to vector<8x128xf32>
    %7 = arith.maximumf %5, %6 : vector<8x128xf32>
    %c0_6 = arith.constant 0 : index
    %c0_7 = arith.constant 0 : index
    %8 = vector.load %arg4[%c0_6, %c0_7] : memref<128x128xf32, #tpu.memory_space<vmem>>, vector<128x128xf32>
    %cst_8 = arith.constant dense<0.000000e+00> : vector<8x128xf32>
    %9 = tpu.matmul %7, %8, %cst_8 {dimension_numbers = #tpu.dot_dimension_numbers<[1], [0], [0], [1], [0, 0, 1, 1], [], []>} : vector<8x128xf32>, vector<128x128xf32>, vector<8x128xf32> -> vector<8x128xf32>
    %c0_9 = arith.constant 0 : index
    %c0_10 = arith.constant 0 : index
    %10 = vector.load %arg5[%c0_9, %c0_10] : memref<1x128xf32, #tpu.memory_space<vmem>>, vector<1x128xf32>
    %11 = vector.broadcast %10 : vector<1x128xf32> to vector<8x128xf32>
    %12 = arith.addf %9, %11 : vector<8x128xf32>
    %cst_11 = arith.constant 0.000000e+00 : f32
    %13 = vector.broadcast %cst_11 : f32 to vector<8x128xf32>
    %14 = arith.maximumf %12, %13 : vector<8x128xf32>
    %c0_12 = arith.constant 0 : index
    %c0_13 = arith.constant 0 : index
    %15 = vector.load %arg6[%c0_12, %c0_13] : memref<128x128xf32, #tpu.memory_space<vmem>>, vector<128x128xf32>
    %cst_14 = arith.constant dense<0.000000e+00> : vector<8x128xf32>
    %16 = tpu.matmul %14, %15, %cst_14 {dimension_numbers = #tpu.dot_dimension_numbers<[1], [0], [0], [1], [0, 0, 1, 1], [], []>} : vector<8x128xf32>, vector<128x128xf32>, vector<8x128xf32> -> vector<8x128xf32>
    %c0_15 = arith.constant 0 : index
    %c0_16 = arith.constant 0 : index
    %17 = vector.load %arg7[%c0_15, %c0_16] : memref<1x128xf32, #tpu.memory_space<vmem>>, vector<1x128xf32>
    %18 = vector.broadcast %17 : vector<1x128xf32> to vector<8x128xf32>
    %19 = arith.addf %16, %18 : vector<8x128xf32>
    %c0_17 = arith.constant 0 : index
    %c0_18 = arith.constant 0 : index
    %20 = vector.load %arg8[%c0_17, %c0_18] : memref<8x128xf32, #tpu.memory_space<vmem>>, vector<8x128xf32>
    tpu.vector_store %arg8[%c0_17, %c0_18], %19 {strides = array<i32>} : memref<8x128xf32, #tpu.memory_space<vmem>>, vector<8x128xf32>,
    return
  }
  func.func @transform_0(%arg0: i32) -> (i32, i32) {
    %c0_i32 = arith.constant 0 : i32
    %c0_i32_0 = arith.constant 0 : i32
    return %arg0, %c0_i32 : i32, i32
  }
  func.func @transform_1(%arg0: i32) -> (i32, i32) {
    %c0_i32 = arith.constant 0 : i32
    %c0_i32_0 = arith.constant 0 : i32
    %c0_i32_1 = arith.constant 0 : i32
    return %c0_i32, %c0_i32_0 : i32, i32
  }
  func.func @transform_2(%arg0: i32) -> (i32, i32) {
    %c0_i32 = arith.constant 0 : i32
    %c0_i32_0 = arith.constant 0 : i32
    %c0_i32_1 = arith.constant 0 : i32
    return %c0_i32, %c0_i32_0 : i32, i32
  }
  func.func @transform_3(%arg0: i32) -> (i32, i32) {
    %c0_i32 = arith.constant 0 : i32
    %c0_i32_0 = arith.constant 0 : i32
    %c0_i32_1 = arith.constant 0 : i32
    return %c0_i32, %c0_i32_0 : i32, i32
  }
  func.func @transform_4(%arg0: i32) -> (i32, i32) {
    %c0_i32 = arith.constant 0 : i32
    %c0_i32_0 = arith.constant 0 : i32
    %c0_i32_1 = arith.constant 0 : i32
    return %c0_i32, %c0_i32_0 : i32, i32
  }
  func.func @transform_5(%arg0: i32) -> (i32, i32) {
    %c0_i32 = arith.constant 0 : i32
    %c0_i32_0 = arith.constant 0 : i32
    %c0_i32_1 = arith.constant 0 : i32
    return %c0_i32, %c0_i32_0 : i32, i32
  }
  func.func @transform_6(%arg0: i32) -> (i32, i32) {
    %c0_i32 = arith.constant 0 : i32
    %c0_i32_0 = arith.constant 0 : i32
    %c0_i32_1 = arith.constant 0 : i32
    return %c0_i32, %c0_i32_0 : i32, i32
  }
  func.func @transform_7(%arg0: i32) -> (i32, i32) {
    %c0_i32 = arith.constant 0 : i32
    %c0_i32_0 = arith.constant 0 : i32
    return %arg0, %c0_i32 : i32, i32
  }
}

</mosaic_0001>

<llo_original>
// kernel: tpu_custom_call.1
$region0: #{tpu_custom_call.1}
  #allocation0 [shape = 'u32[]', space=smem, size = 0x4, offset = 0x4, fixed_abs, tag = 'smem constant byte address 0x4 - core index']
  #allocation1 [shape = 'u32[72,128]{1,0:T(1,128)}', space=vmem, size = 0x9000, scoped, tag = 'internal scratch']
  %s0 = inlined_call_operand.hbm [shape: f32[8,256], index: 0, kind: input, shape index: {}]
  %s1 = inlined_call_operand.hbm [shape: f32[256,128], index: 1, kind: input, shape index: {}]
  %s2 = inlined_call_operand.vmem [shape: f32[1,128], index: 2, kind: input, shape index: {}]
  %s3 = inlined_call_operand.hbm [shape: f32[128,128], index: 3, kind: input, shape index: {}]
  %s4 = inlined_call_operand.vmem [shape: f32[1,128], index: 4, kind: input, shape index: {}]
  %s5 = inlined_call_operand.hbm [shape: f32[128,128], index: 5, kind: input, shape index: {}]
  %s6 = inlined_call_operand.vmem [shape: f32[1,128], index: 6, kind: input, shape index: {}]
  %s7 = inlined_call_operand.hbm [shape: f32[8,128], index: 7, kind: output, shape index: {}]
  %s8 = sld [smem:[#allocation0]]
  $region54: #{tpu_custom_call.1} parent=0
    _
  %s10 = ssub.s32 1, %s8
  %s11 = scalar_select 0, %s10, %s8
  $region1: #{tpu_custom_call.1} parent=0
    #allocation2 [shape = 'u8[8192]{0}', space=vmem, size = 0x2000, scoped, tag = 'input window, operand 0, single buffered']
    #allocation3 [shape = 's32[1]{0}', space=sflag, size = 0x4, scoped, tag = 'scoped memory for tpu_custom_call.1']
    #allocation4 [shape = 's32[1]{0}', space=sflag, size = 0x4, scoped, tag = 'scoped memory for tpu_custom_call.1']
    #allocation5 [shape = 'u8[131072]{0}', space=vmem, size = 0x20000, scoped, tag = 'input window, operand 1, single buffered']
    #allocation6 [shape = 's32[1]{0}', space=sflag, size = 0x4, scoped, tag = 'scoped memory for tpu_custom_call.1']
    #allocation7 [shape = 'u8[65536]{0}', space=vmem, size = 0x10000, scoped, tag = 'input window, operand 3, single buffered']
    #allocation8 [shape = 'u8[65536]{0}', space=vmem, size = 0x10000, scoped, tag = 'input window, operand 5, single buffered']
    #allocation9 [shape = 's32[1]{0}', space=sflag, size = 0x4, scoped, tag = 'scoped memory for tpu_custom_call.1']
    #allocation10 [shape = 'u8[4096]{0}', space=vmem, size = 0x1000, scoped, tag = 'output window, operand 0, single buffered']
    %12 = vsyncpa [#allocation3], 0
    %13 = vsyncpa [#allocation6], 0
    %14 = vsyncpa [#allocation9], 0
    %15 = vsyncpa [#allocation4], 0
    // Predicated region
    $region2: #{tpu_custom_call.1} parent=1 // pred_check
      _
    $region3: #{tpu_custom_call.1} parent=1 // pred_check_branch
      %17 = sbr.rel (0) target = $region5
    $region4: #{tpu_custom_call.1} parent=1 // pred_region
      %19 = vsyncadd [#allocation3], 0
      %s21 = sshll.u32 %s0, 4
      %s22 = int_to_ptr.hbm [resolvable:$true] %s21
      %s23 = sshll.u32 [#allocation2], 4
      %s24 = int_to_ptr.vmem [resolvable:$true] %s23
      %26 = dma.hbm_to_vmem [thread:$0]  %s22, 256, %s24, [#allocation3]
    $region5: #{tpu_custom_call.1} parent=1 // pred_fallthru
      _
    // Predicated region
    $region6: #{tpu_custom_call.1} parent=1 // pred_check
      _
    $region7: #{tpu_custom_call.1} parent=1 // pred_check_branch
      %28 = sbr.rel (0) target = $region9
    $region8: #{tpu_custom_call.1} parent=1 // pred_region
      %30 = vsyncadd [#allocation6], 0
      %s31 = sshll.u32 %s1, 4
      %s32 = int_to_ptr.hbm [resolvable:$true] %s31
      %s33 = sshll.u32 [#allocation5], 4
      %s34 = int_to_ptr.vmem [resolvable:$true] %s33
      %39 = dma.hbm_to_vmem [thread:$0]  %s32, 4096, %s34, [#allocation6], 128, 128, 8
    $region9: #{tpu_custom_call.1} parent=1 // pred_fallthru
      _
    // Predicated region
    $region10: #{tpu_custom_call.1} parent=1 // pred_check
      _
    $region11: #{tpu_custom_call.1} parent=1 // pred_check_branch
      %41 = sbr.rel (0) target = $region13
    $region12: #{tpu_custom_call.1} parent=1 // pred_region
      _
    $region13: #{tpu_custom_call.1} parent=1 // pred_fallthru
      _
    // Predicated region
    $region14: #{tpu_custom_call.1} parent=1 // pred_check
      _
    $region15: #{tpu_custom_call.1} parent=1 // pred_check_branch
      %43 = sbr.rel (0) target = $region17
    $region16: #{tpu_custom_call.1} parent=1 // pred_region
      %45 = vsyncadd [#allocation6], 0
      %s46 = sshll.u32 %s3, 4
      %s47 = int_to_ptr.hbm [resolvable:$true] %s46
      %s48 = sshll.u32 [#allocation7], 4
      %s49 = int_to_ptr.vmem [resolvable:$true] %s48
      %54 = dma.hbm_to_vmem [thread:$0]  %s47, 2048, %s49, [#allocation6], 128, 128, 8
    $region17: #{tpu_custom_call.1} parent=1 // pred_fallthru
      _
    // Predicated region
    $region18: #{tpu_custom_call.1} parent=1 // pred_check
      _
    $region19: #{tpu_custom_call.1} parent=1 // pred_check_branch
      %56 = sbr.rel (0) target = $region21
    $region20: #{tpu_custom_call.1} parent=1 // pred_region
      _
    $region21: #{tpu_custom_call.1} parent=1 // pred_fallthru
      _
    // Predicated region
    $region22: #{tpu_custom_call.1} parent=1 // pred_check
      _
    $region23: #{tpu_custom_call.1} parent=1 // pred_check_branch
      %58 = sbr.rel (0) target = $region25
    $region24: #{tpu_custom_call.1} parent=1 // pred_region
      %60 = vsyncadd [#allocation9], 0
      %s61 = sshll.u32 %s5, 4
      %s62 = int_to_ptr.hbm [resolvable:$true] %s61
      %s63 = sshll.u32 [#allocation8], 4
      %s64 = int_to_ptr.vmem [resolvable:$true] %s63
      %69 = dma.hbm_to_vmem [thread:$0]  %s62, 2048, %s64, [#allocation9], 128, 128, 8
    $region25: #{tpu_custom_call.1} parent=1 // pred_fallthru
      _
    // Predicated region
    $region26: #{tpu_custom_call.1} parent=1 // pred_check
      _
    $region27: #{tpu_custom_call.1} parent=1 // pred_check_branch
      %71 = sbr.rel (0) target = $region29
    $region28: #{tpu_custom_call.1} parent=1 // pred_region
      _
    $region29: #{tpu_custom_call.1} parent=1 // pred_fallthru
      _
    // Predicated region
    $region30: #{tpu_custom_call.1} parent=1 // pred_check
      _
    $region31: #{tpu_custom_call.1} parent=1 // pred_check_branch
      %73 = sbr.rel (0) target = $region33
    $region32: #{tpu_custom_call.1} parent=1 // pred_region
      %75 = dma.done [#allocation3], 256
    $region33: #{tpu_custom_call.1} parent=1 // pred_fallthru
      _
    // Predicated region
    $region34: #{tpu_custom_call.1} parent=1 // pred_check
      _
    $region35: #{tpu_custom_call.1} parent=1 // pred_check_branch
      %77 = sbr.rel (0) target = $region37
    $region36: #{tpu_custom_call.1} parent=1 // pred_region
      %79 = dma.done [#allocation6], 4096
    $region37: #{tpu_custom_call.1} parent=1 // pred_fallthru
      _
    // Predicated region
    $region38: #{tpu_custom_call.1} parent=1 // pred_check
      _
    $region39: #{tpu_custom_call.1} parent=1 // pred_check_branch
      %81 = sbr.rel (0) target = $region41
    $region40: #{tpu_custom_call.1} parent=1 // pred_region
      %83 = dma.done [#allocation6], 2048
    $region41: #{tpu_custom_call.1} parent=1 // pred_fallthru
      _
    // Predicated region
    $region42: #{tpu_custom_call.1} parent=1 // pred_check
      _
    $region43: #{tpu_custom_call.1} parent=1 // pred_check_branch
      %85 = sbr.rel (0) target = $region45
    $region44: #{tpu_custom_call.1} parent=1 // pred_region
      %87 = dma.done [#allocation9], 2048
    $region45: #{tpu_custom_call.1} parent=1 // pred_fallthru
      _
    %v88 = vld [vmem:[#allocation2] sm:$0xff]
    %v89 = vld [vmem:[#allocation2 + $0x8] sm:$0xff]
    %v90 = vld [vmem:[#allocation5] sm:$0xff]
    %v91 = vld [vmem:[#allocation5 + $0x8] sm:$0xff]
    %v92 = vld [vmem:[#allocation5 + $0x10] sm:$0xff]
    %v93 = vld [vmem:[#allocation5 + $0x18] sm:$0xff]
    %v94 = vld [vmem:[#allocation5 + $0x20] sm:$0xff]
    %v95 = vld [vmem:[#allocation5 + $0x28] sm:$0xff]
    %v96 = vld [vmem:[#allocation5 + $0x30] sm:$0xff]
    %v97 = vld [vmem:[#allocation5 + $0x38] sm:$0xff]
    %v98 = vld [vmem:[#allocation5 + $0x40] sm:$0xff]
    %v99 = vld [vmem:[#allocation5 + $0x48] sm:$0xff]
    %v100 = vld [vmem:[#allocation5 + $0x50] sm:$0xff]
    %v101 = vld [vmem:[#allocation5 + $0x58] sm:$0xff]
    %v102 = vld [vmem:[#allocation5 + $0x60] sm:$0xff]
    %v103 = vld [vmem:[#allocation5 + $0x68] sm:$0xff]
    %v104 = vld [vmem:[#allocation5 + $0x70] sm:$0xff]
    %v105 = vld [vmem:[#allocation5 + $0x78] sm:$0xff]
    %v106 = vld [vmem:[#allocation5 + $0x80] sm:$0xff]
    %v107 = vld [vmem:[#allocation5 + $0x88] sm:$0xff]
    %v108 = vld [vmem:[#allocation5 + $0x90] sm:$0xff]
    %v109 = vld [vmem:[#allocation5 + $0x98] sm:$0xff]
    %v110 = vld [vmem:[#allocation5 + $0xa0] sm:$0xff]
    %v111 = vld [vmem:[#allocation5 + $0xa8] sm:$0xff]
    %v112 = vld [vmem:[#allocation5 + $0xb0] sm:$0xff]
    %v113 = vld [vmem:[#allocation5 + $0xb8] sm:$0xff]
    %v114 = vld [vmem:[#allocation5 + $0xc0] sm:$0xff]
    %v115 = vld [vmem:[#allocation5 + $0xc8] sm:$0xff]
    %v116 = vld [vmem:[#allocation5 + $0xd0] sm:$0xff]
    %v117 = vld [vmem:[#allocation5 + $0xd8] sm:$0xff]
    %v118 = vld [vmem:[#allocation5 + $0xe0] sm:$0xff]
    %v119 = vld [vmem:[#allocation5 + $0xe8] sm:$0xff]
    %v120 = vld [vmem:[#allocation5 + $0xf0] sm:$0xff]
    %v121 = vld [vmem:[#allocation5 + $0xf8] sm:$0xff]
    %v122 = vld [vmem:[%s2] sm:$0x1]
    %v124 = vperm.slane %v122, 0
    %126 = vmatpush.msra.mxu0 %v105
    %127 = vmatpush.msra.mxu0 %v104
    %128 = vmatpush.msra.mxu0 %v103
    %129 = vmatpush.msra.mxu0 %v102
    %130 = vmatpush.msra.mxu0 %v101
    %131 = vmatpush.msra.mxu0 %v100
    %132 = vmatpush.msra.mxu0 %v99
    %133 = vmatpush.msra.mxu0 %v98
    %134 = vmatpush.msra.mxu0 %v97
    %135 = vmatpush.msra.mxu0 %v96
    %136 = vmatpush.msra.mxu0 %v95
    %137 = vmatpush.msra.mxu0 %v94
    %138 = vmatpush.msra.mxu0 %v93
    %139 = vmatpush.msra.mxu0 %v92
    %140 = vmatpush.msra.mxu0 %v91
    %141 = vmatpush.msra.mxu0 %v90
    %142 = vmatmul.f32.gmra.mxu0 %v88
    %v143 = vpop.f32.mrf.mxu0
    %v144 = vadd.f32 %v124, %v143
    %145 = vdwg.mxu0
    %146 = vmatpush.msra.mxu0 %v121
    %147 = vmatpush.msra.mxu0 %v120
    %148 = vmatpush.msra.mxu0 %v119
    %149 = vmatpush.msra.mxu0 %v118
    %150 = vmatpush.msra.mxu0 %v117
    %151 = vmatpush.msra.mxu0 %v116
    %152 = vmatpush.msra.mxu0 %v115
    %153 = vmatpush.msra.mxu0 %v114
    %154 = vmatpush.msra.mxu0 %v113
    %155 = vmatpush.msra.mxu0 %v112
    %156 = vmatpush.msra.mxu0 %v111
    %157 = vmatpush.msra.mxu0 %v110
    %158 = vmatpush.msra.mxu0 %v109
    %159 = vmatpush.msra.mxu0 %v108
    %160 = vmatpush.msra.mxu0 %v107
    %161 = vmatpush.msra.mxu0 %v106
    %162 = vmatmul.f32.gmra.mxu0 %v89
    %v163 = vpop.f32.mrf.mxu0
    %v164 = vadd.f32 %v144, %v163
    %165 = vdwg.mxu0
    %v166 = vmax.f32 %v164, 0.0
    %v167 = vld [vmem:[#allocation7] sm:$0xff]
    %v168 = vld [vmem:[#allocation7 + $0x8] sm:$0xff]
    %v169 = vld [vmem:[#allocation7 + $0x10] sm:$0xff]
    %v170 = vld [vmem:[#allocation7 + $0x18] sm:$0xff]
    %v171 = vld [vmem:[#allocation7 + $0x20] sm:$0xff]
    %v172 = vld [vmem:[#allocation7 + $0x28] sm:$0xff]
    %v173 = vld [vmem:[#allocation7 + $0x30] sm:$0xff]
    %v174 = vld [vmem:[#allocation7 + $0x38] sm:$0xff]
    %v175 = vld [vmem:[#allocation7 + $0x40] sm:$0xff]
    %v176 = vld [vmem:[#allocation7 + $0x48] sm:$0xff]
    %v177 = vld [vmem:[#allocation7 + $0x50] sm:$0xff]
    %v178 = vld [vmem:[#allocation7 + $0x58] sm:$0xff]
    %v179 = vld [vmem:[#allocation7 + $0x60] sm:$0xff]
    %v180 = vld [vmem:[#allocation7 + $0x68] sm:$0xff]
    %v181 = vld [vmem:[#allocation7 + $0x70] sm:$0xff]
    %v182 = vld [vmem:[#allocation7 + $0x78] sm:$0xff]
    %v183 = vld [vmem:[%s4] sm:$0x1]
    %v185 = vperm.slane %v183, 0
    %187 = vmatpush.msra.mxu0 %v182
    %188 = vmatpush.msra.mxu0 %v181
    %189 = vmatpush.msra.mxu0 %v180
    %190 = vmatpush.msra.mxu0 %v179
    %191 = vmatpush.msra.mxu0 %v178
    %192 = vmatpush.msra.mxu0 %v177
    %193 = vmatpush.msra.mxu0 %v176
    %194 = vmatpush.msra.mxu0 %v175
    %195 = vmatpush.msra.mxu0 %v174
    %196 = vmatpush.msra.mxu0 %v173
    %197 = vmatpush.msra.mxu0 %v172
    %198 = vmatpush.msra.mxu0 %v171
    %199 = vmatpush.msra.mxu0 %v170
    %200 = vmatpush.msra.mxu0 %v169
    %201 = vmatpush.msra.mxu0 %v168
    %202 = vmatpush.msra.mxu0 %v167
    %203 = vmatmul.f32.gmra.mxu0 %v166
    %v204 = vpop.f32.mrf.mxu0
    %v205 = vadd.f32 %v185, %v204
    %206 = vdwg.mxu0
    %v207 = vmax.f32 %v205, 0.0
    %v208 = vld [vmem:[#allocation8] sm:$0xff]
    %v209 = vld [vmem:[#allocation8 + $0x8] sm:$0xff]
    %v210 = vld [vmem:[#allocation8 + $0x10] sm:$0xff]
    %v211 = vld [vmem:[#allocation8 + $0x18] sm:$0xff]
    %v212 = vld [vmem:[#allocation8 + $0x20] sm:$0xff]
    %v213 = vld [vmem:[#allocation8 + $0x28] sm:$0xff]
    %v214 = vld [vmem:[#allocation8 + $0x30] sm:$0xff]
    %v215 = vld [vmem:[#allocation8 + $0x38] sm:$0xff]
    %v216 = vld [vmem:[#allocation8 + $0x40] sm:$0xff]
    %v217 = vld [vmem:[#allocation8 + $0x48] sm:$0xff]
    %v218 = vld [vmem:[#allocation8 + $0x50] sm:$0xff]
    %v219 = vld [vmem:[#allocation8 + $0x58] sm:$0xff]
    %v220 = vld [vmem:[#allocation8 + $0x60] sm:$0xff]
    %v221 = vld [vmem:[#allocation8 + $0x68] sm:$0xff]
    %v222 = vld [vmem:[#allocation8 + $0x70] sm:$0xff]
    %v223 = vld [vmem:[#allocation8 + $0x78] sm:$0xff]
    %v224 = vld [vmem:[%s6] sm:$0x1]
    %v226 = vperm.slane %v224, 0
    %228 = vmatpush.msra.mxu0 %v223
    %229 = vmatpush.msra.mxu0 %v222
    %230 = vmatpush.msra.mxu0 %v221
    %231 = vmatpush.msra.mxu0 %v220
    %232 = vmatpush.msra.mxu0 %v219
    %233 = vmatpush.msra.mxu0 %v218
    %234 = vmatpush.msra.mxu0 %v217
    %235 = vmatpush.msra.mxu0 %v216
    %236 = vmatpush.msra.mxu0 %v215
    %237 = vmatpush.msra.mxu0 %v214
    %238 = vmatpush.msra.mxu0 %v213
    %239 = vmatpush.msra.mxu0 %v212
    %240 = vmatpush.msra.mxu0 %v211
    %241 = vmatpush.msra.mxu0 %v210
    %242 = vmatpush.msra.mxu0 %v209
    %243 = vmatpush.msra.mxu0 %v208
    %244 = vmatmul.f32.gmra.mxu0 %v207
    %v245 = vpop.f32.mrf.mxu0
    %v246 = vadd.f32 %v226, %v245
    %247 = vdwg.mxu0
    %248 = vst [vmem:[#allocation10] sm:$0xff] %v246
    // Predicated region
    $region46: #{tpu_custom_call.1} parent=1 // pred_check
      _
    $region47: #{tpu_custom_call.1} parent=1 // pred_check_branch
      %250 = sbr.rel (0) target = $region49
    $region48: #{tpu_custom_call.1} parent=1 // pred_region
      %252 = vsyncadd [#allocation4], 0
      %s254 = sshll.u32 [#allocation10], 4
      %s255 = int_to_ptr.vmem [resolvable:$true] %s254
      %s256 = sshll.u32 %s7, 4
      %s257 = int_to_ptr.hbm [resolvable:$true] %s256
      %259 = dma.vmem_to_hbm [thread:$0]  %s255, 128, %s257, [#allocation4]
    $region49: #{tpu_custom_call.1} parent=1 // pred_fallthru
      _
    // Predicated region
    $region50: #{tpu_custom_call.1} parent=1 // pred_check
      _
    $region51: #{tpu_custom_call.1} parent=1 // pred_check_branch
      %261 = sbr.rel (0) target = $region53
    $region52: #{tpu_custom_call.1} parent=1 // pred_region
      %263 = dma.done [#allocation4], 128
    $region53: #{tpu_custom_call.1} parent=1 // pred_fallthru
      _
    %264 = vsyncpa [#allocation3], 1
    %265 = vsyncpa [#allocation6], 1
    %266 = vsyncpa [#allocation9], 1
    %267 = vsyncpa [#allocation4], 1

</llo_original>
